<compile_context>
chip_gen: v6e
topology: v6e:2x2x1
jax: 0.10.0
libtpu: 0.0.40
codegen_flags: <defaults>
</compile_context>

<pallas_src>
import jax
import jax.numpy as jnp
from jax.experimental import pallas as pl
from jax.experimental.pallas import tpu as pltpu

H = 768        # PLM hidden size (fixed by nn.Linear(768, 128))
D1 = 128       # cls_l1 output
D2 = 3         # cls_l2 output (3 ideology classes)
D2_PAD = 128   # lane-dense padded logits width

INV_SQRT2 = 0.7071067811865476


def _round_up(x, m):
    return ((x + m - 1) // m) * m


def _exact_gelu(x):
    # PyTorch nn.GELU() default = exact (erf-based) GELU.
    return 0.5 * x * (1.0 + jax.lax.erf(x * INV_SQRT2))


def _choose_tile(B, block_b):
    """Batch tile: full dim for tiny B, else sublane-aligned and >=2 tiles."""
    if B <= 8:
        return B                          # single tile; full-dim block is layout-legal
    half = _round_up((B + 1) // 2, 8)     # >=2 tiles when possible (v7x dual-TC)
    return min(block_b, half)


# ---------------------------------------------------------------------------
# Kernel
# ---------------------------------------------------------------------------
def ideology_head_kernel(cls_ref, w1_ref, b1_ref, w2_ref, b2_ref, o_ref):
    # cls_ref: (TB, H) tile of CLS representations. Only the CLS row of each
    # sequence ever leaves HBM (see BlockSpec in the wrapper).
    w1 = w1_ref[...]
    cls = cls_ref[...].astype(w1.dtype)          # in-register cast, no HBM roundtrip

    # cls_l1: (TB, H) @ (H, D1), f32 accumulate, + b1.
    h = jnp.dot(cls, w1, preferred_element_type=jnp.float32) + b1_ref[...]
    h = _exact_gelu(h)
    # dropout(p): identity at inference time.
    # TODO(synk): training-mode dropout (random mask + 1/(1-p) scaling) not implemented.

    # cls_l2: (TB, D1) @ (D1, D2_PAD) (columns 3..127 zero-padded), f32 acc, + b2.
    w2 = w2_ref[...]
    out = jnp.dot(h.astype(w2.dtype), w2, preferred_element_type=jnp.float32) + b2_ref[...]
    o_ref[...] = out.astype(o_ref.dtype)


# ---------------------------------------------------------------------------
# One-time parameter prep (call at init, NOT per forward)
# ---------------------------------------------------------------------------
def prepare_ideology_head_params(w1, b1, w2, b2, *, weights_dtype=jnp.bfloat16):
    """Pad W2/b2 to lane-dense 128 columns, reshape biases, cast weights once.

    weights_dtype=jnp.bfloat16 (default) = weights-only quantization of the head
    (halves weight HBM traffic, f32 accumulation kept).  Pass jnp.float32 for an
    exact match to the PyTorch f32 head.
    """
    w1p = jnp.asarray(w1, weights_dtype)                                   # (768, 128)
    w2p = jnp.zeros((D1, D2_PAD), weights_dtype).at[:, :D2].set(
        jnp.asarray(w2, weights_dtype))                                    # (128, 128)
    b1p = jnp.asarray(b1, jnp.float32).reshape(1, D1)                      # (1, 128)
    b2p = jnp.zeros((1, D2_PAD), jnp.float32).at[0, :D2].set(
        jnp.asarray(b2, jnp.float32))                                      # (1, 128)
    return w1p, b1p, w2p, b2p


# ---------------------------------------------------------------------------
# Forward wrapper
# ---------------------------------------------------------------------------
def ideology_net_head(text_embeds, params, *, block_b=None):
    """Fused classification head of IdeologyNet.

    text_embeds: (B, S, H) float32 -- last_hidden_state of the PLM encoder.
    params:      output of prepare_ideology_head_params (cached at init).
    returns:     (B, 3)   float32 logits.
    """
    w1p, b1p, w2p, b2p = params
    B, S, Hh = text_embeds.shape
    assert Hh == H

    # Free contiguous reshape; the activation BlockSpec below DMAs only columns
    # [0:H] of each row, i.e. exactly the CLS token, so the other S-1 rows of
    # every sequence never leave HBM and no (B, H) slice is materialized.
    flat = text_embeds.reshape(B, S * H)

    if block_b is None:
        block_b = 1024 if w1p.dtype == jnp.bfloat16 else 512
    tb = _choose_tile(B, block_b)
    grid = (pl.cdiv(B, tb),)

    itemsize = jnp.dtype(flat.dtype).itemsize
    w_bytes = (w1p.size * jnp.dtype(w1p.dtype).itemsize
               + w2p.size * jnp.dtype(w2p.dtype).itemsize
               + (b1p.size + b2p.size) * 4)
    cost = pl.CostEstimate(
        flops=2 * B * (H * D1 + D1 * D2_PAD),
        transcendentals=B * D1,
        bytes_accessed=B * H * itemsize + w_bytes + B * D2_PAD * 4,
    )

    out = pl.pallas_call(
        ideology_head_kernel,
        out_shape=jax.ShapeDtypeStruct((B, D2_PAD), jnp.float32),
        grid=grid,
        in_specs=[
            # Activations: one batch tile of CLS rows per grid step
            # (strided DMA straight out of (B, S*H); double-buffered).
            pl.BlockSpec((tb, H), lambda i: (i, 0)),
            # Weights / biases: constant block index -> stay VMEM-resident.
            pl.BlockSpec((H, D1), lambda i: (0, 0)),
            pl.BlockSpec((1, D1), lambda i: (0, 0)),
            pl.BlockSpec((D1, D2_PAD), lambda i: (0, 0)),
            pl.BlockSpec((1, D2_PAD), lambda i: (0, 0)),
        ],
        out_specs=pl.BlockSpec((tb, D2_PAD), lambda i: (i, 0)),
        compiler_params=pltpu.CompilerParams(
            dimension_semantics=("parallel",),
        ),
        cost_estimate=cost,
    )(flat, w1p, b1p, w2p, b2p)

    # Strip the lane padding of the logits (tiny (B,3) slice).
    return out[:, :D2]


def _reference(text_embeds, w1, b1, w2, b2):
    cls = text_embeds[:, 0, :]
    h = cls @ w1 + b1
    h = 0.5 * h * (1.0 + jax.lax.erf(h * INV_SQRT2))
    return h @ w2 + b2


if __name__ == "__main__":
    key = jax.random.PRNGKey(0)
    k_x, k_w1, k_b1, k_w2, k_b2, k_x2 = jax.random.split(key, 6)

    B, S = 2, 8  # small batch / seq; hidden must be 768 to match Linear(768, 128)
    # Stand-in for plm_encoder(ids_text, mask_text).last_hidden_state
    # (the pretrained encoder itself is not re-implemented -- checkpoint load).
    text_embeds = jax.random.normal(k_x, (B, S, H), dtype=jnp.float32)

    # Deterministic synthetic parameters (shapes of nn.Linear(768,128)/nn.Linear(128,3)).
    w1 = jax.random.normal(k_w1, (H, D1), dtype=jnp.float32) * 0.02
    b1 = jax.random.normal(k_b1, (D1,), dtype=jnp.float32) * 0.02
    w2 = jax.random.normal(k_w2, (D1, D2), dtype=jnp.float32) * 0.02
    b2 = jax.random.normal(k_b2, (D2,), dtype=jnp.float32) * 0.02

    ref = _reference(text_embeds, w1, b1, w2, b2)

    # --- f32 weights path (exact), tiny batch: single full-dim tile ---
    params_f32 = prepare_ideology_head_params(w1, b1, w2, b2,
                                              weights_dtype=jnp.float32)
    out = jax.block_until_ready(ideology_net_head(text_embeds, params_f32))
    assert out.shape == (B, D2), out.shape
    assert jnp.allclose(out, ref, atol=1e-4, rtol=1e-4), (out, ref)

    # --- f32 path, multi-tile ragged grid (B=260 -> two 136-row tiles) ---
    B2 = 260
    text_embeds2 = jax.random.normal(k_x2, (B2, S, H), dtype=jnp.float32)
    out2 = jax.block_until_ready(ideology_net_head(text_embeds2, params_f32))
    ref2 = _reference(text_embeds2, w1, b1, w2, b2)
    assert out2.shape == (B2, D2), out2.shape
    assert jnp.allclose(out2, ref2, atol=1e-4, rtol=1e-4)

    # --- default serving config: bf16 weights-only quantization, f32 accumulate ---
    # (logits deviate from the f32 reference by O(1e-3); fine for 3-class argmax)
    params_bf16 = prepare_ideology_head_params(w1, b1, w2, b2)
    out_bf16 = jax.block_until_ready(ideology_net_head(text_embeds, params_bf16))
    assert out_bf16.shape == (B, D2)
    assert jnp.allclose(out_bf16, ref, atol=5e-2, rtol=5e-2)

    out2_bf16 = jax.block_until_ready(ideology_net_head(text_embeds2, params_bf16))
    assert out2_bf16.shape == (B2, D2)
    assert jnp.allclose(out2_bf16, ref2, atol=5e-2, rtol=5e-2)

    print("KERNEL_OK")
</pallas_src>

<mosaic_0001>
module attributes {stable_mosaic.version = 11 : i64} {
  func.func @ideology_head_kernel(%arg0: i32, %arg1: memref<2x768xf32, #tpu.memory_space<vmem>>, %arg2: memref<768x128xf32, #tpu.memory_space<vmem>>, %arg3: memref<1x128xf32, #tpu.memory_space<vmem>>, %arg4: memref<128x128xf32, #tpu.memory_space<vmem>>, %arg5: memref<1x128xf32, #tpu.memory_space<vmem>>, %arg6: memref<2x128xf32, #tpu.memory_space<vmem>>) attributes {dimension_semantics = [#tpu.dimension_semantics<parallel>], iteration_bounds = array<i64: 1>, scalar_prefetch = 0 : i64, scratch_operands = 0 : i64, tpu.core_type = #tpu.core_type<tc>, window_params = [{transform_indices = @transform_0, window_bounds = array<i64: 2, 768>}, {pipeline_mode = #tpu.pipeline_mode<synchronous>, transform_indices = @transform_1, window_bounds = array<i64: 768, 128>}, {pipeline_mode = #tpu.pipeline_mode<synchronous>, transform_indices = @transform_2, window_bounds = array<i64: 1, 128>}, {pipeline_mode = #tpu.pipeline_mode<synchronous>, transform_indices = @transform_3, window_bounds = array<i64: 128, 128>}, {pipeline_mode = #tpu.pipeline_mode<synchronous>, transform_indices = @transform_4, window_bounds = array<i64: 1, 128>}, {transform_indices = @transform_5, window_bounds = array<i64: 2, 128>}]} {
    %c0 = arith.constant 0 : index
    %c0_0 = arith.constant 0 : index
    %0 = vector.load %arg2[%c0, %c0_0] : memref<768x128xf32, #tpu.memory_space<vmem>>, vector<768x128xf32>
    %c0_1 = arith.constant 0 : index
    %c0_2 = arith.constant 0 : index
    %1 = vector.load %arg1[%c0_1, %c0_2] : memref<2x768xf32, #tpu.memory_space<vmem>>, vector<2x768xf32>
    %cst = arith.constant dense<0.000000e+00> : vector<2x128xf32>
    %2 = tpu.matmul %1, %0, %cst {dimension_numbers = #tpu.dot_dimension_numbers<[1], [0], [0], [1], [0, 0, 1, 1], [], []>} : vector<2x768xf32>, vector<768x128xf32>, vector<2x128xf32> -> vector<2x128xf32>
    %c0_3 = arith.constant 0 : index
    %c0_4 = arith.constant 0 : index
    %3 = vector.load %arg3[%c0_3, %c0_4] : memref<1x128xf32, #tpu.memory_space<vmem>>, vector<1x128xf32>
    %4 = vector.broadcast %3 : vector<1x128xf32> to vector<2x128xf32>
    %5 = arith.addf %2, %4 : vector<2x128xf32>
    %cst_5 = arith.constant 5.000000e-01 : f32
    %6 = vector.broadcast %cst_5 : f32 to vector<2x128xf32>
    %7 = arith.mulf %6, %5 : vector<2x128xf32>
    %cst_6 = arith.constant 0.707106769 : f32
    %8 = vector.broadcast %cst_6 : f32 to vector<2x128xf32>
    %9 = arith.mulf %5, %8 : vector<2x128xf32>
    %10 = math.erf %9 : vector<2x128xf32>
    %cst_7 = arith.constant 1.000000e+00 : f32
    %11 = vector.broadcast %cst_7 : f32 to vector<2x128xf32>
    %12 = arith.addf %11, %10 : vector<2x128xf32>
    %13 = arith.mulf %7, %12 : vector<2x128xf32>
    %c0_8 = arith.constant 0 : index
    %c0_9 = arith.constant 0 : index
    %14 = vector.load %arg4[%c0_8, %c0_9] : memref<128x128xf32, #tpu.memory_space<vmem>>, vector<128x128xf32>
    %cst_10 = arith.constant dense<0.000000e+00> : vector<2x128xf32>
    %15 = tpu.matmul %13, %14, %cst_10 {dimension_numbers = #tpu.dot_dimension_numbers<[1], [0], [0], [1], [0, 0, 1, 1], [], []>} : vector<2x128xf32>, vector<128x128xf32>, vector<2x128xf32> -> vector<2x128xf32>
    %c0_11 = arith.constant 0 : index
    %c0_12 = arith.constant 0 : index
    %16 = vector.load %arg5[%c0_11, %c0_12] : memref<1x128xf32, #tpu.memory_space<vmem>>, vector<1x128xf32>
    %17 = vector.broadcast %16 : vector<1x128xf32> to vector<2x128xf32>
    %18 = arith.addf %15, %17 : vector<2x128xf32>
    %c0_13 = arith.constant 0 : index
    %c0_14 = arith.constant 0 : index
    %19 = vector.load %arg6[%c0_13, %c0_14] : memref<2x128xf32, #tpu.memory_space<vmem>>, vector<2x128xf32>
    tpu.vector_store %arg6[%c0_13, %c0_14], %18 {strides = array<i32>} : memref<2x128xf32, #tpu.memory_space<vmem>>, vector<2x128xf32>,
    return
  }
  func.func @transform_0(%arg0: i32) -> (i32, i32) {
    %c0_i32 = arith.constant 0 : i32
    %c0_i32_0 = arith.constant 0 : i32
    return %arg0, %c0_i32 : i32, i32
  }
  func.func @transform_1(%arg0: i32) -> (i32, i32) {
    %c0_i32 = arith.constant 0 : i32
    %c0_i32_0 = arith.constant 0 : i32
    %c0_i32_1 = arith.constant 0 : i32
    return %c0_i32, %c0_i32_0 : i32, i32
  }
  func.func @transform_2(%arg0: i32) -> (i32, i32) {
    %c0_i32 = arith.constant 0 : i32
    %c0_i32_0 = arith.constant 0 : i32
    %c0_i32_1 = arith.constant 0 : i32
    return %c0_i32, %c0_i32_0 : i32, i32
  }
  func.func @transform_3(%arg0: i32) -> (i32, i32) {
    %c0_i32 = arith.constant 0 : i32
    %c0_i32_0 = arith.constant 0 : i32
    %c0_i32_1 = arith.constant 0 : i32
    return %c0_i32, %c0_i32_0 : i32, i32
  }
  func.func @transform_4(%arg0: i32) -> (i32, i32) {
    %c0_i32 = arith.constant 0 : i32
    %c0_i32_0 = arith.constant 0 : i32
    %c0_i32_1 = arith.constant 0 : i32
    return %c0_i32, %c0_i32_0 : i32, i32
  }
  func.func @transform_5(%arg0: i32) -> (i32, i32) {
    %c0_i32 = arith.constant 0 : i32
    %c0_i32_0 = arith.constant 0 : i32
    return %arg0, %c0_i32 : i32, i32
  }
}

</mosaic_0001>

<llo_original>
// kernel: tpu_custom_call.1
$region0: #{tpu_custom_call.1}
  #allocation0 [shape = 'u32[]', space=smem, size = 0x4, offset = 0x4, fixed_abs, tag = 'smem constant byte address 0x4 - core index']
  #allocation1 [shape = 'u32[144,128]{1,0:T(1,128)}', space=vmem, size = 0x12000, scoped, tag = 'internal scratch']
  %s0 = inlined_call_operand.hbm [shape: f32[2,6144], index: 0, kind: input, shape index: {}]
  %s1 = inlined_call_operand.hbm [shape: f32[768,128], index: 1, kind: input, shape index: {}]
  %s2 = inlined_call_operand.vmem [shape: f32[1,128], index: 2, kind: input, shape index: {}]
  %s3 = inlined_call_operand.hbm [shape: f32[128,128], index: 3, kind: input, shape index: {}]
  %s4 = inlined_call_operand.vmem [shape: f32[1,128], index: 4, kind: input, shape index: {}]
  %s5 = inlined_call_operand.hbm [shape: f32[2,128], index: 5, kind: output, shape index: {}]
  %s6 = sld [smem:[#allocation0]]
  $region42: #{tpu_custom_call.1} parent=0
    _
  %s8 = ssub.s32 1, %s6
  %s9 = scalar_select 0, %s8, %s6
  $region1: #{tpu_custom_call.1} parent=0
    #allocation2 [shape = 'u8[6144]{0}', space=vmem, size = 0x1800, scoped, tag = 'input window, operand 0, single buffered']
    #allocation3 [shape = 's32[1]{0}', space=sflag, size = 0x4, scoped, tag = 'scoped memory for tpu_custom_call.1']
    #allocation4 [shape = 's32[1]{0}', space=sflag, size = 0x4, scoped, tag = 'scoped memory for tpu_custom_call.1']
    #allocation5 [shape = 'u8[393216]{0}', space=vmem, size = 0x60000, scoped, tag = 'input window, operand 1, single buffered']
    #allocation6 [shape = 's32[1]{0}', space=sflag, size = 0x4, scoped, tag = 'scoped memory for tpu_custom_call.1']
    #allocation7 [shape = 'u8[65536]{0}', space=vmem, size = 0x10000, scoped, tag = 'input window, operand 3, single buffered']
    #allocation8 [shape = 'u8[1024]{0}', space=vmem, size = 0x400, scoped, tag = 'output window, operand 0, single buffered']
    %10 = vsyncpa [#allocation3], 0
    %11 = vsyncpa [#allocation6], 0
    %12 = vsyncpa [#allocation4], 0
    // Predicated region
    $region2: #{tpu_custom_call.1} parent=1 // pred_check
      _
    $region3: #{tpu_custom_call.1} parent=1 // pred_check_branch
      %14 = sbr.rel (0) target = $region5
    $region4: #{tpu_custom_call.1} parent=1 // pred_region
      %s16 = ssub.s32 192, 192
      %17 = vsyncadd [#allocation3], %s16
      %s19 = sshll.u32 [#allocation2], 4
      %s20 = int_to_ptr.vmem [resolvable:$true] %s19
      %22 = dma.hbm_to_vmem [thread:$0]  %s0, 192, %s20, [#allocation3]
    $region5: #{tpu_custom_call.1} parent=1 // pred_fallthru
      _
    // Predicated region
    $region6: #{tpu_custom_call.1} parent=1 // pred_check
      _
    $region7: #{tpu_custom_call.1} parent=1 // pred_check_branch
      %24 = sbr.rel (0) target = $region9
    $region8: #{tpu_custom_call.1} parent=1 // pred_region
      %s26 = ssub.s32 12288, 12288
      %27 = vsyncadd [#allocation6], %s26
      %s28 = sshll.u32 [#allocation5], 4
      %s29 = int_to_ptr.vmem [resolvable:$true] %s28
      %34 = dma.hbm_to_vmem [thread:$0]  %s1, 12288, %s29, [#allocation6], 128, 128, 8
    $region9: #{tpu_custom_call.1} parent=1 // pred_fallthru
      _
    // Predicated region
    $region10: #{tpu_custom_call.1} parent=1 // pred_check
      _
    $region11: #{tpu_custom_call.1} parent=1 // pred_check_branch
      %36 = sbr.rel (0) target = $region13
    $region12: #{tpu_custom_call.1} parent=1 // pred_region
      _
    $region13: #{tpu_custom_call.1} parent=1 // pred_fallthru
      _
    // Predicated region
    $region14: #{tpu_custom_call.1} parent=1 // pred_check
      _
    $region15: #{tpu_custom_call.1} parent=1 // pred_check_branch
      %38 = sbr.rel (0) target = $region17
    $region16: #{tpu_custom_call.1} parent=1 // pred_region
      %s40 = ssub.s32 2048, 2048
      %41 = vsyncadd [#allocation6], %s40
      %s42 = sshll.u32 [#allocation7], 4
      %s43 = int_to_ptr.vmem [resolvable:$true] %s42
      %48 = dma.hbm_to_vmem [thread:$0]  %s3, 2048, %s43, [#allocation6], 128, 128, 8
    $region17: #{tpu_custom_call.1} parent=1 // pred_fallthru
      _
    // Predicated region
    $region18: #{tpu_custom_call.1} parent=1 // pred_check
      _
    $region19: #{tpu_custom_call.1} parent=1 // pred_check_branch
      %50 = sbr.rel (0) target = $region21
    $region20: #{tpu_custom_call.1} parent=1 // pred_region
      _
    $region21: #{tpu_custom_call.1} parent=1 // pred_fallthru
      _
    // Predicated region
    $region22: #{tpu_custom_call.1} parent=1 // pred_check
      _
    $region23: #{tpu_custom_call.1} parent=1 // pred_check_branch
      %52 = sbr.rel (0) target = $region25
    $region24: #{tpu_custom_call.1} parent=1 // pred_region
      %53 = dma.done [#allocation3], 192
    $region25: #{tpu_custom_call.1} parent=1 // pred_fallthru
      _
    // Predicated region
    $region26: #{tpu_custom_call.1} parent=1 // pred_check
      _
    $region27: #{tpu_custom_call.1} parent=1 // pred_check_branch
      %55 = sbr.rel (0) target = $region29
    $region28: #{tpu_custom_call.1} parent=1 // pred_region
      %56 = dma.done [#allocation6], 12288
    $region29: #{tpu_custom_call.1} parent=1 // pred_fallthru
      _
    // Predicated region
    $region30: #{tpu_custom_call.1} parent=1 // pred_check
      _
    $region31: #{tpu_custom_call.1} parent=1 // pred_check_branch
      %58 = sbr.rel (0) target = $region33
    $region32: #{tpu_custom_call.1} parent=1 // pred_region
      %59 = dma.done [#allocation6], 2048
    $region33: #{tpu_custom_call.1} parent=1 // pred_fallthru
      _
    %v60 = vld [vmem:[#allocation5] sm:$0xff]
    %v61 = vld [vmem:[#allocation5 + $0x8] sm:$0xff]
    %v62 = vld [vmem:[#allocation5 + $0x10] sm:$0xff]
    %v63 = vld [vmem:[#allocation5 + $0x18] sm:$0xff]
    %v64 = vld [vmem:[#allocation5 + $0x20] sm:$0xff]
    %v65 = vld [vmem:[#allocation5 + $0x28] sm:$0xff]
    %v66 = vld [vmem:[#allocation5 + $0x30] sm:$0xff]
    %v67 = vld [vmem:[#allocation5 + $0x38] sm:$0xff]
    %v68 = vld [vmem:[#allocation5 + $0x40] sm:$0xff]
    %v69 = vld [vmem:[#allocation5 + $0x48] sm:$0xff]
    %v70 = vld [vmem:[#allocation5 + $0x50] sm:$0xff]
    %v71 = vld [vmem:[#allocation5 + $0x58] sm:$0xff]
    %v72 = vld [vmem:[#allocation5 + $0x60] sm:$0xff]
    %v73 = vld [vmem:[#allocation5 + $0x68] sm:$0xff]
    %v74 = vld [vmem:[#allocation5 + $0x70] sm:$0xff]
    %v75 = vld [vmem:[#allocation5 + $0x78] sm:$0xff]
    %v76 = vld [vmem:[#allocation5 + $0x80] sm:$0xff]
    %v77 = vld [vmem:[#allocation5 + $0x88] sm:$0xff]
    %v78 = vld [vmem:[#allocation5 + $0x90] sm:$0xff]
    %v79 = vld [vmem:[#allocation5 + $0x98] sm:$0xff]
    %v80 = vld [vmem:[#allocation5 + $0xa0] sm:$0xff]
    %v81 = vld [vmem:[#allocation5 + $0xa8] sm:$0xff]
    %v82 = vld [vmem:[#allocation5 + $0xb0] sm:$0xff]
    %v83 = vld [vmem:[#allocation5 + $0xb8] sm:$0xff]
    %v84 = vld [vmem:[#allocation5 + $0xc0] sm:$0xff]
    %v85 = vld [vmem:[#allocation5 + $0xc8] sm:$0xff]
    %v86 = vld [vmem:[#allocation5 + $0xd0] sm:$0xff]
    %v87 = vld [vmem:[#allocation5 + $0xd8] sm:$0xff]
    %v88 = vld [vmem:[#allocation5 + $0xe0] sm:$0xff]
    %v89 = vld [vmem:[#allocation5 + $0xe8] sm:$0xff]
    %v90 = vld [vmem:[#allocation5 + $0xf0] sm:$0xff]
    %v91 = vld [vmem:[#allocation5 + $0xf8] sm:$0xff]
    %v92 = vld [vmem:[#allocation5 + $0x100] sm:$0xff]
    %v93 = vld [vmem:[#allocation5 + $0x108] sm:$0xff]
    %v94 = vld [vmem:[#allocation5 + $0x110] sm:$0xff]
    %v95 = vld [vmem:[#allocation5 + $0x118] sm:$0xff]
    %v96 = vld [vmem:[#allocation5 + $0x120] sm:$0xff]
    %v97 = vld [vmem:[#allocation5 + $0x128] sm:$0xff]
    %v98 = vld [vmem:[#allocation5 + $0x130] sm:$0xff]
    %v99 = vld [vmem:[#allocation5 + $0x138] sm:$0xff]
    %v100 = vld [vmem:[#allocation5 + $0x140] sm:$0xff]
    %v101 = vld [vmem:[#allocation5 + $0x148] sm:$0xff]
    %v102 = vld [vmem:[#allocation5 + $0x150] sm:$0xff]
    %v103 = vld [vmem:[#allocation5 + $0x158] sm:$0xff]
    %v104 = vld [vmem:[#allocation5 + $0x160] sm:$0xff]
    %v105 = vld [vmem:[#allocation5 + $0x168] sm:$0xff]
    %v106 = vld [vmem:[#allocation5 + $0x170] sm:$0xff]
    %v107 = vld [vmem:[#allocation5 + $0x178] sm:$0xff]
    %v108 = vld [vmem:[#allocation5 + $0x180] sm:$0xff]
    %v109 = vld [vmem:[#allocation5 + $0x188] sm:$0xff]
    %v110 = vld [vmem:[#allocation5 + $0x190] sm:$0xff]
    %v111 = vld [vmem:[#allocation5 + $0x198] sm:$0xff]
    %v112 = vld [vmem:[#allocation5 + $0x1a0] sm:$0xff]
    %v113 = vld [vmem:[#allocation5 + $0x1a8] sm:$0xff]
    %v114 = vld [vmem:[#allocation5 + $0x1b0] sm:$0xff]
    %v115 = vld [vmem:[#allocation5 + $0x1b8] sm:$0xff]
    %v116 = vld [vmem:[#allocation5 + $0x1c0] sm:$0xff]
    %v117 = vld [vmem:[#allocation5 + $0x1c8] sm:$0xff]
    %v118 = vld [vmem:[#allocation5 + $0x1d0] sm:$0xff]
    %v119 = vld [vmem:[#allocation5 + $0x1d8] sm:$0xff]
    %v120 = vld [vmem:[#allocation5 + $0x1e0] sm:$0xff]
    %v121 = vld [vmem:[#allocation5 + $0x1e8] sm:$0xff]
    %v122 = vld [vmem:[#allocation5 + $0x1f0] sm:$0xff]
    %v123 = vld [vmem:[#allocation5 + $0x1f8] sm:$0xff]
    %v124 = vld [vmem:[#allocation5 + $0x200] sm:$0xff]
    %v125 = vld [vmem:[#allocation5 + $0x208] sm:$0xff]
    %v126 = vld [vmem:[#allocation5 + $0x210] sm:$0xff]
    %v127 = vld [vmem:[#allocation5 + $0x218] sm:$0xff]
    %v128 = vld [vmem:[#allocation5 + $0x220] sm:$0xff]
    %v129 = vld [vmem:[#allocation5 + $0x228] sm:$0xff]
    %v130 = vld [vmem:[#allocation5 + $0x230] sm:$0xff]
    %v131 = vld [vmem:[#allocation5 + $0x238] sm:$0xff]
    %v132 = vld [vmem:[#allocation5 + $0x240] sm:$0xff]
    %v133 = vld [vmem:[#allocation5 + $0x248] sm:$0xff]
    %v134 = vld [vmem:[#allocation5 + $0x250] sm:$0xff]
    %v135 = vld [vmem:[#allocation5 + $0x258] sm:$0xff]
    %v136 = vld [vmem:[#allocation5 + $0x260] sm:$0xff]
    %v137 = vld [vmem:[#allocation5 + $0x268] sm:$0xff]
    %v138 = vld [vmem:[#allocation5 + $0x270] sm:$0xff]
    %v139 = vld [vmem:[#allocation5 + $0x278] sm:$0xff]
    %v140 = vld [vmem:[#allocation5 + $0x280] sm:$0xff]
    %v141 = vld [vmem:[#allocation5 + $0x288] sm:$0xff]
    %v142 = vld [vmem:[#allocation5 + $0x290] sm:$0xff]
    %v143 = vld [vmem:[#allocation5 + $0x298] sm:$0xff]
    %v144 = vld [vmem:[#allocation5 + $0x2a0] sm:$0xff]
    %v145 = vld [vmem:[#allocation5 + $0x2a8] sm:$0xff]
    %v146 = vld [vmem:[#allocation5 + $0x2b0] sm:$0xff]
    %v147 = vld [vmem:[#allocation5 + $0x2b8] sm:$0xff]
    %v148 = vld [vmem:[#allocation5 + $0x2c0] sm:$0xff]
    %v149 = vld [vmem:[#allocation5 + $0x2c8] sm:$0xff]
    %v150 = vld [vmem:[#allocation5 + $0x2d0] sm:$0xff]
    %v151 = vld [vmem:[#allocation5 + $0x2d8] sm:$0xff]
    %v152 = vld [vmem:[#allocation5 + $0x2e0] sm:$0xff]
    %v153 = vld [vmem:[#allocation5 + $0x2e8] sm:$0xff]
    %v154 = vld [vmem:[#allocation5 + $0x2f0] sm:$0xff]
    %v155 = vld [vmem:[#allocation5 + $0x2f8] sm:$0xff]
    %v156 = vld [vmem:[#allocation2] sm:$0xff]
    %v157 = vld [vmem:[#allocation2 + $0x8] sm:$0xf]
    %v158 = vld [vmem:[%s2] sm:$0x1]
    %v160 = vlaneseq
    %v161 = vshrl.u32 %v160, 7
    %v162 = vsub.s32 0, %v161
    %v163 = vrot.slane %v158, %v162
    %v167 = vcombine.high %v156, %v156
    %v169 = vunpack.c.l.s4 1983009808
    %v170 = vunpack.c.0.s8 %v169
    %v171 = vlaneseq
    %v172 = vshrl.u32 %v171, 7
    %v173 = vsub.s32 %v170, %v172
    %v174 = vrot.slane %v156, %v173
    %v176 = vunpack.c.l.s4 1983009808
    %v177 = vunpack.c.0.s8 %v176
    %v178 = vlaneseq
    %v179 = vshrl.u32 %v178, 7
    %v180 = vsub.s32 %v177, %v179
    %v181 = vrot.slane %v167, %v180
    %v182 = vcombine.high %v174, %v174
    %v183 = vcombine.high %v181, %v181
    %v185 = vunpack.c.l.s4 1983009808
    %v186 = vunpack.c.0.s8 %v185
    %v187 = vlaneseq
    %v188 = vshrl.u32 %v187, 7
    %v189 = vsub.s32 %v186, %v188
    %v190 = vrot.slane %v157, %v189
    %v191 = vcombine.high %v190, %v190
    %198 = vmatprep.subr.mxu0 0.0
    %199 = vmatpush1.msra.mxu0 %v75
    %200 = vmatprep.subr.mxu0 0.0
    %201 = vmatpush1.msra.mxu0 %v74
    %202 = vmatprep.subr.mxu0 0.0
    %203 = vmatpush1.msra.mxu0 %v73
    %204 = vmatprep.subr.mxu0 0.0
    %205 = vmatpush1.msra.mxu0 %v72
    %206 = vmatprep.subr.mxu0 0.0
    %207 = vmatpush1.msra.mxu0 %v71
    %208 = vmatprep.subr.mxu0 0.0
    %209 = vmatpush1.msra.mxu0 %v70
    %210 = vmatprep.subr.mxu0 0.0
    %211 = vmatpush1.msra.mxu0 %v69
    %212 = vmatprep.subr.mxu0 0.0
    %213 = vmatpush1.msra.mxu0 %v68
    %214 = vmatprep.subr.mxu0 0.0
    %215 = vmatpush1.msra.mxu0 %v67
    %216 = vmatprep.subr.mxu0 0.0
    %217 = vmatpush1.msra.mxu0 %v66
    %218 = vmatprep.subr.mxu0 0.0
    %219 = vmatpush1.msra.mxu0 %v65
    %220 = vmatprep.subr.mxu0 0.0
    %221 = vmatpush1.msra.mxu0 %v64
    %222 = vmatprep.subr.mxu0 0.0
    %223 = vmatpush1.msra.mxu0 %v63
    %224 = vmatprep.subr.mxu0 0.0
    %225 = vmatpush1.msra.mxu0 %v62
    %226 = vmatprep.subr.mxu0 0.0
    %227 = vmatpush1.msra.mxu0 %v61
    %228 = vmatprep.subr.mxu0 0.0
    %229 = vmatpush1.msra.mxu0 %v60
    %230 = vmatprep.subr.mxu0 0.0
    %231 = vmatpush2.msra.mxu0 %v91
    %232 = vmatprep.subr.mxu0 0.0
    %233 = vmatpush2.msra.mxu0 %v90
    %234 = vmatprep.subr.mxu0 0.0
    %235 = vmatpush2.msra.mxu0 %v89
    %236 = vmatprep.subr.mxu0 0.0
    %237 = vmatpush2.msra.mxu0 %v88
    %238 = vmatprep.subr.mxu0 0.0
    %239 = vmatpush2.msra.mxu0 %v87
    %240 = vmatprep.subr.mxu0 0.0
    %241 = vmatpush2.msra.mxu0 %v86
    %242 = vmatprep.subr.mxu0 0.0
    %243 = vmatpush2.msra.mxu0 %v85
    %244 = vmatprep.subr.mxu0 0.0
    %245 = vmatpush2.msra.mxu0 %v84
    %246 = vmatprep.subr.mxu0 0.0
    %247 = vmatpush2.msra.mxu0 %v83
    %248 = vmatprep.subr.mxu0 0.0
    %249 = vmatpush2.msra.mxu0 %v82
    %250 = vmatprep.subr.mxu0 0.0
    %251 = vmatpush2.msra.mxu0 %v81
    %252 = vmatprep.subr.mxu0 0.0
    %253 = vmatpush2.msra.mxu0 %v80
    %254 = vmatprep.subr.mxu0 0.0
    %255 = vmatpush2.msra.mxu0 %v79
    %256 = vmatprep.subr.mxu0 0.0
    %257 = vmatpush2.msra.mxu0 %v78
    %258 = vmatprep.subr.mxu0 0.0
    %259 = vmatpush2.msra.mxu0 %v77
    %260 = vmatprep.subr.mxu0 0.0
    %261 = vmatpush2.msra.mxu0 %v76
    %262 = vmatprep.mubr.f32.mxu0 %v182
    %263 = vmatmul.mubr.f32.gmra.mxu0 %v174
    %v264 = vpop.f32.mrf.mxu0
    %v265 = vadd.f32 %v163, %v264
    %v266 = vpop.f32.mrf.mxu0
    %267 = vdwg.mxu0
    %268 = vmatprep.subr.mxu0 0.0
    %269 = vmatpush1.msra.mxu0 %v107
    %270 = vmatprep.subr.mxu0 0.0
    %271 = vmatpush1.msra.mxu0 %v106
    %272 = vmatprep.subr.mxu0 0.0
    %273 = vmatpush1.msra.mxu0 %v105
    %274 = vmatprep.subr.mxu0 0.0
    %275 = vmatpush1.msra.mxu0 %v104
    %276 = vmatprep.subr.mxu0 0.0
    %277 = vmatpush1.msra.mxu0 %v103
    %278 = vmatprep.subr.mxu0 0.0
    %279 = vmatpush1.msra.mxu0 %v102
    %280 = vmatprep.subr.mxu0 0.0
    %281 = vmatpush1.msra.mxu0 %v101
    %282 = vmatprep.subr.mxu0 0.0
    %283 = vmatpush1.msra.mxu0 %v100
    %284 = vmatprep.subr.mxu0 0.0
    %285 = vmatpush1.msra.mxu0 %v99
    %286 = vmatprep.subr.mxu0 0.0
    %287 = vmatpush1.msra.mxu0 %v98
    %288 = vmatprep.subr.mxu0 0.0
    %289 = vmatpush1.msra.mxu0 %v97
    %290 = vmatprep.subr.mxu0 0.0
    %291 = vmatpush1.msra.mxu0 %v96
    %292 = vmatprep.subr.mxu0 0.0
    %293 = vmatpush1.msra.mxu0 %v95
    %294 = vmatprep.subr.mxu0 0.0
    %295 = vmatpush1.msra.mxu0 %v94
    %296 = vmatprep.subr.mxu0 0.0
    %297 = vmatpush1.msra.mxu0 %v93
    %298 = vmatprep.subr.mxu0 0.0
    %299 = vmatpush1.msra.mxu0 %v92
    %300 = vmatprep.subr.mxu0 0.0
    %301 = vmatpush2.msra.mxu0 %v123
    %302 = vmatprep.subr.mxu0 0.0
    %303 = vmatpush2.msra.mxu0 %v122
    %304 = vmatprep.subr.mxu0 0.0
    %305 = vmatpush2.msra.mxu0 %v121
    %306 = vmatprep.subr.mxu0 0.0
    %307 = vmatpush2.msra.mxu0 %v120
    %308 = vmatprep.subr.mxu0 0.0
    %309 = vmatpush2.msra.mxu0 %v119
    %310 = vmatprep.subr.mxu0 0.0
    %311 = vmatpush2.msra.mxu0 %v118
    %312 = vmatprep.subr.mxu0 0.0
    %313 = vmatpush2.msra.mxu0 %v117
    %314 = vmatprep.subr.mxu0 0.0
    %315 = vmatpush2.msra.mxu0 %v116
    %316 = vmatprep.subr.mxu0 0.0
    %317 = vmatpush2.msra.mxu0 %v115
    %318 = vmatprep.subr.mxu0 0.0
    %319 = vmatpush2.msra.mxu0 %v114
    %320 = vmatprep.subr.mxu0 0.0
    %321 = vmatpush2.msra.mxu0 %v113
    %322 = vmatprep.subr.mxu0 0.0
    %323 = vmatpush2.msra.mxu0 %v112
    %324 = vmatprep.subr.mxu0 0.0
    %325 = vmatpush2.msra.mxu0 %v111
    %326 = vmatprep.subr.mxu0 0.0
    %327 = vmatpush2.msra.mxu0 %v110
    %328 = vmatprep.subr.mxu0 0.0
    %329 = vmatpush2.msra.mxu0 %v109
    %330 = vmatprep.subr.mxu0 0.0
    %331 = vmatpush2.msra.mxu0 %v108
    %332 = vmatprep.mubr.f32.mxu0 %v183
    %333 = vmatmul.mubr.f32.gmra.mxu0 %v181
    %v334 = vpop.f32.mrf.mxu0
    %v335 = vadd.f32 %v265, %v334
    %v336 = vpop.f32.mrf.mxu0
    %337 = vdwg.mxu0
    %338 = vmatprep.subr.mxu0 0.0
    %339 = vmatpush1.msra.mxu0 %v139
    %340 = vmatprep.subr.mxu0 0.0
    %341 = vmatpush1.msra.mxu0 %v138
    %342 = vmatprep.subr.mxu0 0.0
    %343 = vmatpush1.msra.mxu0 %v137
    %344 = vmatprep.subr.mxu0 0.0
    %345 = vmatpush1.msra.mxu0 %v136
    %346 = vmatprep.subr.mxu0 0.0
    %347 = vmatpush1.msra.mxu0 %v135
    %348 = vmatprep.subr.mxu0 0.0
    %349 = vmatpush1.msra.mxu0 %v134
    %350 = vmatprep.subr.mxu0 0.0
    %351 = vmatpush1.msra.mxu0 %v133
    %352 = vmatprep.subr.mxu0 0.0
    %353 = vmatpush1.msra.mxu0 %v132
    %354 = vmatprep.subr.mxu0 0.0
    %355 = vmatpush1.msra.mxu0 %v131
    %356 = vmatprep.subr.mxu0 0.0
    %357 = vmatpush1.msra.mxu0 %v130
    %358 = vmatprep.subr.mxu0 0.0
    %359 = vmatpush1.msra.mxu0 %v129
    %360 = vmatprep.subr.mxu0 0.0
    %361 = vmatpush1.msra.mxu0 %v128
    %362 = vmatprep.subr.mxu0 0.0
    %363 = vmatpush1.msra.mxu0 %v127
    %364 = vmatprep.subr.mxu0 0.0
    %365 = vmatpush1.msra.mxu0 %v126
    %366 = vmatprep.subr.mxu0 0.0
    %367 = vmatpush1.msra.mxu0 %v125
    %368 = vmatprep.subr.mxu0 0.0
    %369 = vmatpush1.msra.mxu0 %v124
    %370 = vmatprep.subr.mxu0 0.0
    %371 = vmatpush2.msra.mxu0 %v155
    %372 = vmatprep.subr.mxu0 0.0
    %373 = vmatpush2.msra.mxu0 %v154
    %374 = vmatprep.subr.mxu0 0.0
    %375 = vmatpush2.msra.mxu0 %v153
    %376 = vmatprep.subr.mxu0 0.0
    %377 = vmatpush2.msra.mxu0 %v152
    %378 = vmatprep.subr.mxu0 0.0
    %379 = vmatpush2.msra.mxu0 %v151
    %380 = vmatprep.subr.mxu0 0.0
    %381 = vmatpush2.msra.mxu0 %v150
    %382 = vmatprep.subr.mxu0 0.0
    %383 = vmatpush2.msra.mxu0 %v149
    %384 = vmatprep.subr.mxu0 0.0
    %385 = vmatpush2.msra.mxu0 %v148
    %386 = vmatprep.subr.mxu0 0.0
    %387 = vmatpush2.msra.mxu0 %v147
    %388 = vmatprep.subr.mxu0 0.0
    %389 = vmatpush2.msra.mxu0 %v146
    %390 = vmatprep.subr.mxu0 0.0
    %391 = vmatpush2.msra.mxu0 %v145
    %392 = vmatprep.subr.mxu0 0.0
    %393 = vmatpush2.msra.mxu0 %v144
    %394 = vmatprep.subr.mxu0 0.0
    %395 = vmatpush2.msra.mxu0 %v143
    %396 = vmatprep.subr.mxu0 0.0
    %397 = vmatpush2.msra.mxu0 %v142
    %398 = vmatprep.subr.mxu0 0.0
    %399 = vmatpush2.msra.mxu0 %v141
    %400 = vmatprep.subr.mxu0 0.0
    %401 = vmatpush2.msra.mxu0 %v140
    %402 = vmatprep.mubr.f32.mxu0 %v191
    %403 = vmatmul.mubr.f32.gmra.mxu0 %v190
    %v404 = vpop.f32.mrf.mxu0
    %v405 = vadd.f32 %v335, %v404
    %v406 = vpop.f32.mrf.mxu0
    %407 = vdwg.mxu0
    %v408 = vmul.f32 %v405, 0.5
    %v409 = vmul.f32 %v405, 0.70710677
    %v410 = verf.f32.pop %v409
    %v411 = vadd.f32 %v410, 1.0
    %v412 = vmul.f32 %v408, %v411
    %v413 = vld [vmem:[#allocation7] sm:$0xff]
    %v414 = vld [vmem:[#allocation7 + $0x8] sm:$0xff]
    %v415 = vld [vmem:[#allocation7 + $0x10] sm:$0xff]
    %v416 = vld [vmem:[#allocation7 + $0x18] sm:$0xff]
    %v417 = vld [vmem:[#allocation7 + $0x20] sm:$0xff]
    %v418 = vld [vmem:[#allocation7 + $0x28] sm:$0xff]
    %v419 = vld [vmem:[#allocation7 + $0x30] sm:$0xff]
    %v420 = vld [vmem:[#allocation7 + $0x38] sm:$0xff]
    %v421 = vld [vmem:[#allocation7 + $0x40] sm:$0xff]
    %v422 = vld [vmem:[#allocation7 + $0x48] sm:$0xff]
    %v423 = vld [vmem:[#allocation7 + $0x50] sm:$0xff]
    %v424 = vld [vmem:[#allocation7 + $0x58] sm:$0xff]
    %v425 = vld [vmem:[#allocation7 + $0x60] sm:$0xff]
    %v426 = vld [vmem:[#allocation7 + $0x68] sm:$0xff]
    %v427 = vld [vmem:[#allocation7 + $0x70] sm:$0xff]
    %v428 = vld [vmem:[#allocation7 + $0x78] sm:$0xff]
    %v429 = vld [vmem:[%s4] sm:$0x1]
    %v431 = vlaneseq
    %v432 = vshrl.u32 %v431, 7
    %v433 = vsub.s32 0, %v432
    %v434 = vrot.slane %v429, %v433
    %436 = vmatprep.subr.mxu0 0.0
    %437 = vmatpush1.msra.mxu0 %v428
    %438 = vmatprep.subr.mxu0 0.0
    %439 = vmatpush1.msra.mxu0 %v427
    %440 = vmatprep.subr.mxu0 0.0
    %441 = vmatpush1.msra.mxu0 %v426
    %442 = vmatprep.subr.mxu0 0.0
    %443 = vmatpush1.msra.mxu0 %v425
    %444 = vmatprep.subr.mxu0 0.0
    %445 = vmatpush1.msra.mxu0 %v424
    %446 = vmatprep.subr.mxu0 0.0
    %447 = vmatpush1.msra.mxu0 %v423
    %448 = vmatprep.subr.mxu0 0.0
    %449 = vmatpush1.msra.mxu0 %v422
    %450 = vmatprep.subr.mxu0 0.0
    %451 = vmatpush1.msra.mxu0 %v421
    %452 = vmatprep.subr.mxu0 0.0
    %453 = vmatpush1.msra.mxu0 %v420
    %454 = vmatprep.subr.mxu0 0.0
    %455 = vmatpush1.msra.mxu0 %v419
    %456 = vmatprep.subr.mxu0 0.0
    %457 = vmatpush1.msra.mxu0 %v418
    %458 = vmatprep.subr.mxu0 0.0
    %459 = vmatpush1.msra.mxu0 %v417
    %460 = vmatprep.subr.mxu0 0.0
    %461 = vmatpush1.msra.mxu0 %v416
    %462 = vmatprep.subr.mxu0 0.0
    %463 = vmatpush1.msra.mxu0 %v415
    %464 = vmatprep.subr.mxu0 0.0
    %465 = vmatpush1.msra.mxu0 %v414
    %466 = vmatprep.subr.mxu0 0.0
    %467 = vmatpush1.msra.mxu0 %v413
    %468 = vmatprep.subr.mxu0 0.0
    %469 = vmatpush2.msra.mxu0 0.0
    %470 = vmatprep.subr.mxu0 0.0
    %471 = vmatpush2.msra.mxu0 0.0
    %472 = vmatprep.subr.mxu0 0.0
    %473 = vmatpush2.msra.mxu0 0.0
    %474 = vmatprep.subr.mxu0 0.0
    %475 = vmatpush2.msra.mxu0 0.0
    %476 = vmatprep.subr.mxu0 0.0
    %477 = vmatpush2.msra.mxu0 0.0
    %478 = vmatprep.subr.mxu0 0.0
    %479 = vmatpush2.msra.mxu0 0.0
    %480 = vmatprep.subr.mxu0 0.0
    %481 = vmatpush2.msra.mxu0 0.0
    %482 = vmatprep.subr.mxu0 0.0
    %483 = vmatpush2.msra.mxu0 0.0
    %484 = vmatprep.subr.mxu0 0.0
    %485 = vmatpush2.msra.mxu0 0.0
    %486 = vmatprep.subr.mxu0 0.0
    %487 = vmatpush2.msra.mxu0 0.0
    %488 = vmatprep.subr.mxu0 0.0
    %489 = vmatpush2.msra.mxu0 0.0
    %490 = vmatprep.subr.mxu0 0.0
    %491 = vmatpush2.msra.mxu0 0.0
    %492 = vmatprep.subr.mxu0 0.0
    %493 = vmatpush2.msra.mxu0 0.0
    %494 = vmatprep.subr.mxu0 0.0
    %495 = vmatpush2.msra.mxu0 0.0
    %496 = vmatprep.subr.mxu0 0.0
    %497 = vmatpush2.msra.mxu0 0.0
    %498 = vmatprep.subr.mxu0 0.0
    %499 = vmatpush2.msra.mxu0 0.0
    %500 = vmatprep.mubr.f32.mxu0 0.0
    %501 = vmatmul.mubr.f32.gmra.mxu0 %v412
    %v502 = vpop.f32.mrf.mxu0
    %v503 = vadd.f32 %v434, %v502
    %v504 = vpop.f32.mrf.mxu0
    %505 = vdwg.mxu0
    %506 = vst [vmem:[#allocation8] sm:$0x3] %v503
    // Predicated region
    $region34: #{tpu_custom_call.1} parent=1 // pred_check
      _
    $region35: #{tpu_custom_call.1} parent=1 // pred_check_branch
      %508 = sbr.rel (0) target = $region37
    $region36: #{tpu_custom_call.1} parent=1 // pred_region
      %s510 = ssub.s32 32, 32
      %511 = vsyncadd [#allocation4], %s510
      %s513 = sshll.u32 [#allocation8], 4
      %s514 = int_to_ptr.vmem [resolvable:$true] %s513
      %516 = dma.vmem_to_hbm [thread:$0]  %s514, 32, %s5, [#allocation4]
    $region37: #{tpu_custom_call.1} parent=1 // pred_fallthru
      _
    // Predicated region
    $region38: #{tpu_custom_call.1} parent=1 // pred_check
      _
    $region39: #{tpu_custom_call.1} parent=1 // pred_check_branch
      %518 = sbr.rel (0) target = $region41
    $region40: #{tpu_custom_call.1} parent=1 // pred_region
      %519 = dma.done [#allocation4], 32
    $region41: #{tpu_custom_call.1} parent=1 // pred_fallthru
      _
    %520 = vsyncpa [#allocation3], 1
    %521 = vsyncpa [#allocation6], 1
    %522 = vsyncpa [#allocation4], 1

</llo_original>
